<compile_context>
chip_gen: v5e
topology: v5e:2x2
jax: 0.10.0
libtpu: 0.0.40
codegen_flags: <defaults>
</compile_context>

<pallas_src>
import functools

import numpy as np
import jax
import jax.numpy as jnp
from jax.experimental import pallas as pl
from jax.experimental.pallas import tpu as pltpu

PI = float(np.pi)


def _make_cos_coeffs(num_terms=6):
    """Near-minimax even-polynomial coefficients for cos(t) on |t| <= pi/2.

    Returns ascending coefficients c[k] of sum_k c[k] * (t^2)^k, obtained by a
    least-squares fit at Chebyshev-distributed nodes (≈ Chebyshev projection).
    Max abs error ~2e-10 for 6 terms — far below float32 resolution.
    """
    zmax = (0.5 * np.pi) ** 2
    k = np.arange(1024, dtype=np.float64)
    z = 0.5 * zmax * (1.0 - np.cos((k + 0.5) * np.pi / 1024.0))
    y = np.cos(np.sqrt(z))
    coeffs = np.polynomial.polynomial.polyfit(z, y, num_terms - 1)
    return tuple(float(c) for c in coeffs)


_COS_COEFFS = _make_cos_coeffs(6)   # ascending order in z = t^2


def _cutoff_cos_kernel(x_ref, o_ref, *, cutoff, fast_cos):
    x = x_ref[...]
    xf = x.astype(jnp.float32)   # v5e VPU/EUP have no bf16 path: compute in f32
    if fast_cos:
        # u = theta/pi; reduce u to r in [-1, 1] (exact range reduction), then
        # 0.5*cos(pi*u) + 0.5 == 0.5*cos(pi*r) + 0.5 == cos(pi*r/2)^2 with
        # |pi*r/2| <= pi/2 -> short even polynomial on the VALU.
        u = xf * (1.0 / cutoff)
        r = u - 2.0 * jnp.floor(0.5 * u + 0.5)
        half = r * (0.5 * PI)
        z = half * half
        c = _COS_COEFFS[-1]
        for coef in reversed(_COS_COEFFS[:-1]):
            c = c * z + coef
        y = c * c
    else:
        y = 0.5 * jnp.cos(xf * (PI / cutoff)) + 0.5
    # y[x > cutoff] = 0  (strict comparison, matches the PyTorch module)
    o_ref[...] = jnp.where(xf > cutoff, 0.0, y).astype(o_ref.dtype)


def _round_up(a, b):
    return ((a + b - 1) // b) * b


def _cutoff_cos_jnp(x, cutoff):
    """Plain jnp fallback (used for the tiny unaligned tail / tiny inputs)."""
    xf = x.astype(jnp.float32)
    y = 0.5 * jnp.cos(xf * (PI / cutoff)) + 0.5
    return jnp.where(xf > cutoff, 0.0, y).astype(x.dtype)


def cutoff_cos(x, cutoff=4.0, *, fast_cos=True, max_tile_bytes=4 * 1024 * 1024):
    """Apply the cosine cutoff function elementwise via a Pallas TPU kernel."""
    orig_shape = x.shape
    dtype = x.dtype
    n = int(np.prod(orig_shape)) if orig_shape else 1
    itemsize = jnp.dtype(dtype).itemsize
    cutoff = float(cutoff)

    xflat = x.reshape(-1) if orig_shape != () else x.reshape(1)

    # ---- Lane-dense aligned prefix (free reshape), tiny tail stays in jnp ----
    n_main = n - (n % 128)
    if n_main == 0:
        # Tiny / empty input: not worth a kernel launch.
        return _cutoff_cos_jnp(x, cutoff)

    lanes = 128
    for cand in (1024, 512, 256, 128):
        if n_main % cand == 0:
            lanes = cand
            break
    rows = n_main // lanes
    x_main = xflat if n_main == n else xflat[:n_main]
    x2d = x_main.reshape(rows, lanes)

    # ---- Tile selection ------------------------------------------------------
    sub = {4: 8, 2: 16, 1: 32}.get(itemsize, 8)       # sublane packing per dtype
    bytes_per_row = lanes * itemsize
    max_tile_rows = max(sub, (max_tile_bytes // bytes_per_row) // sub * sub)

    if rows > max_tile_rows:
        tile_rows = max_tile_rows
        nblocks = pl.cdiv(rows, tile_rows)
        # Best-effort even block count so v7x's two TensorCores get balanced work.
        if nblocks > 1 and nblocks % 2 == 1:
            nblocks += 1
            tile_rows = min(max_tile_rows,
                            max(sub, _round_up(pl.cdiv(rows, nblocks), sub)))
    elif rows >= 2 * sub:
        # Whole thing would fit in one tile: split into 2 blocks only
        # (pipeline overlap / 2 TCs), never the old forced 8-way split.
        tile_rows = _round_up(pl.cdiv(rows, 2), sub)
    else:
        tile_rows = rows   # tiny: single full block (block dim == array dim is legal)

    grid = (pl.cdiv(rows, tile_rows),)

    kernel = functools.partial(_cutoff_cos_kernel, cutoff=cutoff, fast_cos=fast_cos)

    cost = pl.CostEstimate(
        flops=(20 if fast_cos else 8) * n_main,
        transcendentals=0 if fast_cos else n_main,
        bytes_accessed=2 * n_main * itemsize,
    )

    out2d = pl.pallas_call(
        kernel,
        out_shape=jax.ShapeDtypeStruct((rows, lanes), dtype),
        grid_spec=pl.GridSpec(
            grid=grid,
            in_specs=[pl.BlockSpec((tile_rows, lanes), lambda i: (i, 0))],
            out_specs=pl.BlockSpec((tile_rows, lanes), lambda i: (i, 0)),
        ),
        compiler_params=pltpu.CompilerParams(
            dimension_semantics=("parallel",),
            vmem_limit_bytes=32 * 1024 * 1024,
        ),
        cost_estimate=cost,
    )(x2d)

    out = out2d.reshape(-1)
    if n_main != n:
        tail = _cutoff_cos_jnp(xflat[n_main:], cutoff)
        out = jnp.concatenate([out, tail])
    return out.reshape(orig_shape)


def _cutoff_cos_ref_np(x, cutoff=4.0):
    """float64 numpy reference (ground truth for accuracy checks)."""
    xd = np.asarray(x, dtype=np.float64)
    y = 0.5 * np.cos(xd / cutoff * np.pi) + 0.5
    y = np.where(xd > cutoff, 0.0, y)
    return y


if __name__ == "__main__":
    key = jax.random.PRNGKey(0)

    # Distance-like tensor (batch=2, ch=4, 16x16), values spanning both sides
    # of the cutoff (0..8 with cutoff=4.0). 2048 elements -> fully aligned slab.
    x = jax.random.uniform(key, (2, 4, 16, 16), dtype=jnp.float32,
                           minval=0.0, maxval=8.0)
    out = jax.block_until_ready(cutoff_cos(x, cutoff=4.0))
    np.testing.assert_allclose(np.asarray(out, dtype=np.float64),
                               _cutoff_cos_ref_np(x, 4.0),
                               rtol=1e-5, atol=5e-6)

    # Unaligned element count (5*7*41 = 1435 -> 1408 aligned + 27 tail), with
    # negative values below -cutoff to exercise the range reduction.
    x2 = jax.random.uniform(jax.random.PRNGKey(1), (5, 7, 41), dtype=jnp.float32,
                            minval=-6.0, maxval=10.0)
    out2 = jax.block_until_ready(cutoff_cos(x2, cutoff=4.0))
    np.testing.assert_allclose(np.asarray(out2, dtype=np.float64),
                               _cutoff_cos_ref_np(x2, 4.0),
                               rtol=1e-5, atol=1e-5)

    # Exact-cos fallback path inside the kernel.
    out3 = jax.block_until_ready(cutoff_cos(x, cutoff=4.0, fast_cos=False))
    np.testing.assert_allclose(np.asarray(out3, dtype=np.float64),
                               _cutoff_cos_ref_np(x, 4.0),
                               rtol=1e-5, atol=5e-6)

    print("KERNEL_OK")
</pallas_src>

<mosaic_0001>
module attributes {stable_mosaic.version = 11 : i64} {
  func.func @_cutoff_cos_kernel(%arg0: i32, %arg1: memref<2x1024xf32, #tpu.memory_space<vmem>>, %arg2: memref<2x1024xf32, #tpu.memory_space<vmem>>) attributes {dimension_semantics = [#tpu.dimension_semantics<parallel>], iteration_bounds = array<i64: 1>, scalar_prefetch = 0 : i64, scratch_operands = 0 : i64, tpu.core_type = #tpu.core_type<tc>, window_params = [{transform_indices = @transform_0, window_bounds = array<i64: 2, 1024>}, {transform_indices = @transform_1, window_bounds = array<i64: 2, 1024>}]} {
    %c0 = arith.constant 0 : index
    %c0_0 = arith.constant 0 : index
    %0 = vector.load %arg1[%c0, %c0_0] : memref<2x1024xf32, #tpu.memory_space<vmem>>, vector<2x1024xf32>
    %cst = arith.constant 2.500000e-01 : f32
    %1 = vector.broadcast %cst : f32 to vector<2x1024xf32>
    %2 = arith.mulf %0, %1 : vector<2x1024xf32>
    %cst_1 = arith.constant 5.000000e-01 : f32
    %3 = vector.broadcast %cst_1 : f32 to vector<2x1024xf32>
    %4 = arith.mulf %3, %2 : vector<2x1024xf32>
    %cst_2 = arith.constant 5.000000e-01 : f32
    %5 = vector.broadcast %cst_2 : f32 to vector<2x1024xf32>
    %6 = arith.addf %4, %5 : vector<2x1024xf32>
    %7 = math.floor %6 : vector<2x1024xf32>
    %cst_3 = arith.constant 2.000000e+00 : f32
    %8 = vector.broadcast %cst_3 : f32 to vector<2x1024xf32>
    %9 = arith.mulf %8, %7 : vector<2x1024xf32>
    %10 = arith.subf %2, %9 : vector<2x1024xf32>
    %cst_4 = arith.constant 1.57079637 : f32
    %11 = vector.broadcast %cst_4 : f32 to vector<2x1024xf32>
    %12 = arith.mulf %10, %11 : vector<2x1024xf32>
    %13 = arith.mulf %12, %12 : vector<2x1024xf32>
    %cst_5 = arith.constant -2.60510774E-7 : f32
    %14 = vector.broadcast %cst_5 : f32 to vector<2x1024xf32>
    %15 = arith.mulf %14, %13 : vector<2x1024xf32>
    %cst_6 = arith.constant 2.47601347E-5 : f32
    %16 = vector.broadcast %cst_6 : f32 to vector<2x1024xf32>
    %17 = arith.addf %15, %16 : vector<2x1024xf32>
    %18 = arith.mulf %17, %13 : vector<2x1024xf32>
    %cst_7 = arith.constant -0.00138883607 : f32
    %19 = vector.broadcast %cst_7 : f32 to vector<2x1024xf32>
    %20 = arith.addf %18, %19 : vector<2x1024xf32>
    %21 = arith.mulf %20, %13 : vector<2x1024xf32>
    %cst_8 = arith.constant 0.0416666344 : f32
    %22 = vector.broadcast %cst_8 : f32 to vector<2x1024xf32>
    %23 = arith.addf %21, %22 : vector<2x1024xf32>
    %24 = arith.mulf %23, %13 : vector<2x1024xf32>
    %cst_9 = arith.constant -5.000000e-01 : f32
    %25 = vector.broadcast %cst_9 : f32 to vector<2x1024xf32>
    %26 = arith.addf %24, %25 : vector<2x1024xf32>
    %27 = arith.mulf %26, %13 : vector<2x1024xf32>
    %cst_10 = arith.constant 1.000000e+00 : f32
    %28 = vector.broadcast %cst_10 : f32 to vector<2x1024xf32>
    %29 = arith.addf %27, %28 : vector<2x1024xf32>
    %30 = arith.mulf %29, %29 : vector<2x1024xf32>
    %cst_11 = arith.constant 4.000000e+00 : f32
    %31 = vector.broadcast %cst_11 : f32 to vector<2x1024xf32>
    %32 = arith.cmpf ogt, %0, %31 : vector<2x1024xf32>
    %cst_12 = arith.constant 0.000000e+00 : f32
    %33 = vector.broadcast %cst_12 : f32 to vector<2x1024xf32>
    %34 = arith.select %32, %33, %30 : vector<2x1024xi1>, vector<2x1024xf32>
    %c0_13 = arith.constant 0 : index
    %c0_14 = arith.constant 0 : index
    %35 = vector.load %arg2[%c0_13, %c0_14] : memref<2x1024xf32, #tpu.memory_space<vmem>>, vector<2x1024xf32>
    tpu.vector_store %arg2[%c0_13, %c0_14], %34 {strides = array<i32>} : memref<2x1024xf32, #tpu.memory_space<vmem>>, vector<2x1024xf32>,
    return
  }
  func.func @transform_0(%arg0: i32) -> (i32, i32) {
    %c0_i32 = arith.constant 0 : i32
    %c0_i32_0 = arith.constant 0 : i32
    return %arg0, %c0_i32 : i32, i32
  }
  func.func @transform_1(%arg0: i32) -> (i32, i32) {
    %c0_i32 = arith.constant 0 : i32
    %c0_i32_0 = arith.constant 0 : i32
    return %arg0, %c0_i32 : i32, i32
  }
}

</mosaic_0001>

<llo_original>
// kernel: tpu_custom_call.1
$region0: #{tpu_custom_call.1}
  #allocation0 [shape = 'u32[]', space=smem, size = 0x4, offset = 0x4, fixed_abs, tag = 'smem constant byte address 0x4 - core index']
  #allocation1 [shape = 'u32[72,128]{1,0:T(1,128)}', space=vmem, size = 0x9000, scoped, tag = 'internal scratch']
  %s0 = inlined_call_operand.hbm [shape: f32[2,1024], index: 0, kind: input, shape index: {}]
  %s1 = inlined_call_operand.hbm [shape: f32[2,1024], index: 1, kind: output, shape index: {}]
  %s2 = sld [smem:[#allocation0]]
  $region18: #{tpu_custom_call.1} parent=0
    _
  %s4 = ssub.s32 1, %s2
  %s5 = scalar_select 0, %s4, %s2
  $region1: #{tpu_custom_call.1} parent=0
    #allocation2 [shape = 'u8[8192]{0}', space=vmem, size = 0x2000, scoped, tag = 'input window, operand 0, single buffered']
    #allocation3 [shape = 's32[1]{0}', space=sflag, size = 0x4, scoped, tag = 'scoped memory for tpu_custom_call.1']
    #allocation4 [shape = 's32[1]{0}', space=sflag, size = 0x4, scoped, tag = 'scoped memory for tpu_custom_call.1']
    #allocation5 [shape = 'u8[8192]{0}', space=vmem, size = 0x2000, scoped, tag = 'output window, operand 0, single buffered']
    %6 = vsyncpa [#allocation3], 0
    %7 = vsyncpa [#allocation4], 0
    // Predicated region
    $region2: #{tpu_custom_call.1} parent=1 // pred_check
      _
    $region3: #{tpu_custom_call.1} parent=1 // pred_check_branch
      %9 = sbr.rel (0) target = $region5
    $region4: #{tpu_custom_call.1} parent=1 // pred_region
      %11 = vsyncadd [#allocation3], 0
      %s13 = sshll.u32 %s0, 4
      %s14 = int_to_ptr.hbm [resolvable:$true] %s13
      %s15 = sshll.u32 [#allocation2], 4
      %s16 = int_to_ptr.vmem [resolvable:$true] %s15
      %18 = dma.hbm_to_vmem [thread:$0]  %s14, 256, %s16, [#allocation3]
    $region5: #{tpu_custom_call.1} parent=1 // pred_fallthru
      _
    // Predicated region
    $region6: #{tpu_custom_call.1} parent=1 // pred_check
      _
    $region7: #{tpu_custom_call.1} parent=1 // pred_check_branch
      %20 = sbr.rel (0) target = $region9
    $region8: #{tpu_custom_call.1} parent=1 // pred_region
      %22 = dma.done [#allocation3], 256
    $region9: #{tpu_custom_call.1} parent=1 // pred_fallthru
      _
    %v23 = vld [vmem:[#allocation2] sm:$0xff]
    %v24 = vld [vmem:[#allocation2 + $0x8] sm:$0xff]
    %v25 = vmul.f32 %v23, 0.25
    %v26 = vmul.f32 %v24, 0.25
    %v27 = vmul.f32 %v25, 0.5
    %v28 = vmul.f32 %v26, 0.5
    %v29 = vadd.f32 %v27, 0.5
    %v30 = vadd.f32 %v28, 0.5
    %v31 = vfloor.f32 %v29
    %v32 = vfloor.f32 %v30
    %v33 = vmul.f32 %v31, 2.0
    %v34 = vmul.f32 %v32, 2.0
    %v35 = vsub.f32 %v25, %v33
    %v36 = vsub.f32 %v26, %v34
    %v37 = vmul.f32 %v35, 1.5707964
    %v38 = vmul.f32 %v36, 1.5707964
    %v39 = vmul.f32 %v37, %v37
    %v40 = vmul.f32 %v38, %v38
    %v41 = vmul.f32 %v39, -2.6051077e-07
    %v42 = vmul.f32 %v40, -2.6051077e-07
    %v43 = vadd.f32 %v41, 2.4760135e-05
    %v44 = vadd.f32 %v42, 2.4760135e-05
    %v45 = vmul.f32 %v43, %v39
    %v46 = vmul.f32 %v44, %v40
    %v47 = vadd.f32 %v45, -0.0013888361
    %v48 = vadd.f32 %v46, -0.0013888361
    %v49 = vmul.f32 %v47, %v39
    %v50 = vmul.f32 %v48, %v40
    %v51 = vadd.f32 %v49, 0.041666634
    %v52 = vadd.f32 %v50, 0.041666634
    %v53 = vmul.f32 %v51, %v39
    %v54 = vmul.f32 %v52, %v40
    %v55 = vadd.f32 %v53, -0.5
    %v56 = vadd.f32 %v54, -0.5
    %v57 = vmul.f32 %v55, %v39
    %v58 = vmul.f32 %v56, %v40
    %v59 = vadd.f32 %v57, 1.0
    %v60 = vadd.f32 %v58, 1.0
    %v61 = vmul.f32 %v59, %v59
    %v62 = vmul.f32 %v60, %v60
    %vm63 = vcmp.gt.f32.partialorder %v23, 4.0
    %vm64 = vcmp.gt.f32.partialorder %v24, 4.0
    %v65 = vsel %vm63, 0.0, %v61
    %v66 = vsel %vm64, 0.0, %v62
    %67 = vst [vmem:[#allocation5] sm:$0xff] %v65
    %68 = vst [vmem:[#allocation5 + $0x8] sm:$0xff] %v66
    // Predicated region
    $region10: #{tpu_custom_call.1} parent=1 // pred_check
      _
    $region11: #{tpu_custom_call.1} parent=1 // pred_check_branch
      %70 = sbr.rel (0) target = $region13
    $region12: #{tpu_custom_call.1} parent=1 // pred_region
      %72 = vsyncadd [#allocation4], 0
      %s74 = sshll.u32 [#allocation5], 4
      %s75 = int_to_ptr.vmem [resolvable:$true] %s74
      %s76 = sshll.u32 %s1, 4
      %s77 = int_to_ptr.hbm [resolvable:$true] %s76
      %79 = dma.vmem_to_hbm [thread:$0]  %s75, 256, %s77, [#allocation4]
    $region13: #{tpu_custom_call.1} parent=1 // pred_fallthru
      _
    // Predicated region
    $region14: #{tpu_custom_call.1} parent=1 // pred_check
      _
    $region15: #{tpu_custom_call.1} parent=1 // pred_check_branch
      %81 = sbr.rel (0) target = $region17
    $region16: #{tpu_custom_call.1} parent=1 // pred_region
      %83 = dma.done [#allocation4], 256
    $region17: #{tpu_custom_call.1} parent=1 // pred_fallthru
      _
    %84 = vsyncpa [#allocation3], 1
    %85 = vsyncpa [#allocation4], 1

</llo_original>
